<compile_context>
chip_gen: v7x
topology: tpu7x:2x2x1
jax: 0.10.0
libtpu: 0.0.40
codegen_flags: <defaults>
</compile_context>

<pallas_src>
import functools

import jax
import jax.numpy as jnp
from jax.experimental import pallas as pl
from jax.experimental.pallas import tpu as pltpu

MEAN = 0.1307
SIGMA = 0.3081

LANE = 128      # f32 lane width
SUBLANE = 8     # f32 sublane count


def _round_up(x, m):
    return (x + m - 1) // m * m


def _fused_mlp_kernel(x_ref, *refs, n_layers, mxu_dtype):
    """refs = (w0, b0, w1, b1, ..., w_{L-1}, b_{L-1}, o_ref).

    Weights are (in_pad, out_pad) in `mxu_dtype` (already transposed, padded,
    and with the Normalization layer folded into layer 0); biases are
    (1, out_pad) f32.  One batch tile runs the whole MLP in-register/VMEM.
    """
    o_ref = refs[-1]
    h = x_ref[...]                     # norm folded into layer-0 weights/bias
    for i in range(n_layers):
        w_ref = refs[2 * i]
        b_ref = refs[2 * i + 1]
        # MXU operands may be bf16 (v6e/v7x fast path); accumulate in f32.
        acc = jnp.dot(h.astype(mxu_dtype), w_ref[...],
                      preferred_element_type=jnp.float32)
        h = acc + b_ref[...]           # bias add / ReLU stay f32 (v5e VPU has no bf16)
        if i + 1 < n_layers:
            h = jnp.maximum(h, 0.0)
    o_ref[...] = h.astype(o_ref.dtype)


def init_params(key, input_size, fc_layers):
    """PyTorch-layout params: list of (w:(out,in), b:(out,)), nn.Linear-style init."""
    params = []
    prev = input_size * input_size
    for fc_size in fc_layers:
        key, kw, kb = jax.random.split(key, 3)
        bound = 1.0 / jnp.sqrt(prev)
        w = jax.random.uniform(kw, (fc_size, prev), jnp.float32, -bound, bound)
        b = jax.random.uniform(kb, (fc_size,), jnp.float32, -bound, bound)
        params.append((w, b))
        prev = fc_size
    return params


def pack_params(params, in_dim, mxu_dtype=jnp.float32):
    """One-time packing.

    * Transpose weights to (in, out), zero-pad feature dims to 128 lanes.
    * Fold Normalization into the first Linear:
        ((x - MEAN)/SIGMA) @ W0^T + b0 == x @ (W0^T/SIGMA) + (b0 - MEAN/SIGMA * W0.sum(1))
    * Optionally store weights in bf16 for the MXU (v6e/v7x); biases stay f32.
    """
    dims = [_round_up(in_dim, LANE)]
    flat = []
    for li, (w, b) in enumerate(params):
        out_d, in_d = w.shape
        d_in_p = dims[-1]
        d_out_p = _round_up(out_d, LANE)
        w_t = w.T.astype(jnp.float32)
        b_eff = b.astype(jnp.float32)
        if li == 0:
            w_t = w_t * (1.0 / SIGMA)
            b_eff = b_eff - (MEAN / SIGMA) * jnp.sum(w.astype(jnp.float32), axis=1)
        w_p = jnp.zeros((d_in_p, d_out_p), jnp.float32).at[:in_d, :out_d].set(w_t)
        b_p = jnp.zeros((1, d_out_p), jnp.float32).at[0, :out_d].set(b_eff)
        flat += [w_p.astype(mxu_dtype), b_p]
        dims.append(d_out_p)
    return {
        "flat": tuple(flat),
        "dims": tuple(dims),
        "in_dim": in_dim,
        "out_dim": params[-1][0].shape[0],
        "n_layers": len(params),
        "mxu_dtype": mxu_dtype,
    }


def fully_connected_forward(x_nchw, packed):
    B = x_nchw.shape[0]
    x_flat = x_nchw.reshape(B, -1).astype(jnp.float32)   # nn.Flatten semantics

    dims = packed["dims"]
    in_dim = packed["in_dim"]
    n_layers = packed["n_layers"]
    mxu_dtype = packed["mxu_dtype"]

    # Pad the feature axis ONLY when it isn't lane-aligned (16*16 = 256 already
    # is) -- no XLA-side pad copy of the dominant x HBM stream.
    if dims[0] != in_dim:
        x_in = jnp.zeros((B, dims[0]), jnp.float32).at[:, :in_dim].set(x_flat)
    else:
        x_in = x_flat

    # Batch tile: multiple of 8 sublanes, capped at 512; pick ~cdiv(B,2) so the
    # "parallel" axis has >= 2 steps (both v7x TensorCores busy; no-op on
    # v5e/v6e).  The ragged last tile's rows are masked on the output write.
    b_tile = min(_round_up(max(pl.cdiv(B, 2), 1), SUBLANE), 512)
    grid = (pl.cdiv(B, b_tile),)

    wbytes = sum(int(t.size) * t.dtype.itemsize for t in packed["flat"])
    flops = 2 * B * sum(dims[i] * dims[i + 1] for i in range(n_layers))
    bytes_accessed = 4 * B * (dims[0] + dims[-1]) + wbytes

    in_specs = [pl.BlockSpec((b_tile, dims[0]), lambda i: (i, 0))]
    # TODO(synk): add pipeline_mode=pl.Buffered(3) to the x spec if a profile
    # shows exposed input DMA at large b_tile.
    for li in range(n_layers):
        d_in, d_out = dims[li], dims[li + 1]
        # Constant index maps -> weights/biases stay resident in VMEM across steps.
        in_specs.append(pl.BlockSpec((d_in, d_out), lambda i: (0, 0)))
        in_specs.append(pl.BlockSpec((1, d_out), lambda i: (0, 0)))

    out_padded = pl.pallas_call(
        functools.partial(_fused_mlp_kernel, n_layers=n_layers, mxu_dtype=mxu_dtype),
        out_shape=jax.ShapeDtypeStruct((B, dims[-1]), jnp.float32),
        grid=grid,
        in_specs=in_specs,
        out_specs=pl.BlockSpec((b_tile, dims[-1]), lambda i: (i, 0)),
        compiler_params=pltpu.CompilerParams(
            dimension_semantics=("parallel",)),
        cost_estimate=pl.CostEstimate(
            flops=flops, transcendentals=0, bytes_accessed=bytes_accessed),
    )(x_in, *packed["flat"])

    # TODO(synk): callers that tolerate bf16 I/O can stream x / out in bf16 to
    # halve HBM traffic on this bandwidth-bound kernel.
    return out_padded[:, :packed["out_dim"]]


def reference_forward(x_nchw, params):
    B = x_nchw.shape[0]
    h = (x_nchw.reshape(B, -1) - MEAN) / SIGMA
    n_layers = len(params)
    for i, (w, b) in enumerate(params):
        h = h @ w.T + b
        if i + 1 < n_layers:
            h = jnp.maximum(h, 0.0)
    return h


if __name__ == "__main__":
    key = jax.random.PRNGKey(0)
    k_x, k_p = jax.random.split(key)

    batch = 2
    input_size = 16           # image is (B, 1, 16, 16) -> flatten to 256
    fc_layers = [32, 32, 10]  # two hidden ReLU layers + output layer

    x = jax.random.uniform(k_x, (batch, 1, input_size, input_size), jnp.float32)
    params = init_params(k_p, input_size, fc_layers)
    ref = reference_forward(x, params)

    # Exact-numerics f32 MXU path.
    packed_f32 = pack_params(params, input_size * input_size, mxu_dtype=jnp.float32)
    out = jax.block_until_ready(fully_connected_forward(x, packed_f32))
    assert out.shape == (batch, fc_layers[-1])
    assert jnp.allclose(out, ref, atol=1e-5, rtol=1e-5)

    # bf16-MXU fast path (v6e/v7x win, also fine on v5e MXU); looser tolerance
    # for bf16 operand rounding.
    packed_bf16 = pack_params(params, input_size * input_size, mxu_dtype=jnp.bfloat16)
    out_bf16 = jax.block_until_ready(fully_connected_forward(x, packed_bf16))
    assert out_bf16.shape == (batch, fc_layers[-1])
    assert jnp.allclose(out_bf16, ref, atol=5e-2, rtol=5e-2)

    print("KERNEL_OK")
</pallas_src>

<mosaic_0001>
module attributes {stable_mosaic.version = 11 : i64} {
  func.func @_fused_mlp_kernel(%arg0: i32, %arg1: memref<8x256xf32, #tpu.memory_space<vmem>>, %arg2: memref<256x128xf32, #tpu.memory_space<vmem>>, %arg3: memref<1x128xf32, #tpu.memory_space<vmem>>, %arg4: memref<128x128xf32, #tpu.memory_space<vmem>>, %arg5: memref<1x128xf32, #tpu.memory_space<vmem>>, %arg6: memref<128x128xf32, #tpu.memory_space<vmem>>, %arg7: memref<1x128xf32, #tpu.memory_space<vmem>>, %arg8: memref<8x128xf32, #tpu.memory_space<vmem>>) attributes {dimension_semantics = [#tpu.dimension_semantics<parallel>], iteration_bounds = array<i64: 1>, scalar_prefetch = 0 : i64, scratch_operands = 0 : i64, tpu.core_type = #tpu.core_type<tc>, window_params = [{transform_indices = @transform_0, window_bounds = array<i64: 8, 256>}, {pipeline_mode = #tpu.pipeline_mode<synchronous>, transform_indices = @transform_1, window_bounds = array<i64: 256, 128>}, {pipeline_mode = #tpu.pipeline_mode<synchronous>, transform_indices = @transform_2, window_bounds = array<i64: 1, 128>}, {pipeline_mode = #tpu.pipeline_mode<synchronous>, transform_indices = @transform_3, window_bounds = array<i64: 128, 128>}, {pipeline_mode = #tpu.pipeline_mode<synchronous>, transform_indices = @transform_4, window_bounds = array<i64: 1, 128>}, {pipeline_mode = #tpu.pipeline_mode<synchronous>, transform_indices = @transform_5, window_bounds = array<i64: 128, 128>}, {pipeline_mode = #tpu.pipeline_mode<synchronous>, transform_indices = @transform_6, window_bounds = array<i64: 1, 128>}, {transform_indices = @transform_7, window_bounds = array<i64: 8, 128>}]} {
    %c0 = arith.constant 0 : index
    %c0_0 = arith.constant 0 : index
    %0 = vector.load %arg1[%c0, %c0_0] : memref<8x256xf32, #tpu.memory_space<vmem>>, vector<8x256xf32>
    %c0_1 = arith.constant 0 : index
    %c0_2 = arith.constant 0 : index
    %1 = vector.load %arg2[%c0_1, %c0_2] : memref<256x128xf32, #tpu.memory_space<vmem>>, vector<256x128xf32>
    %cst = arith.constant dense<0.000000e+00> : vector<8x128xf32>
    %2 = tpu.matmul %0, %1, %cst {dimension_numbers = #tpu.dot_dimension_numbers<[1], [0], [0], [1], [0, 0, 1, 1], [], []>} : vector<8x256xf32>, vector<256x128xf32>, vector<8x128xf32> -> vector<8x128xf32>
    %c0_3 = arith.constant 0 : index
    %c0_4 = arith.constant 0 : index
    %3 = vector.load %arg3[%c0_3, %c0_4] : memref<1x128xf32, #tpu.memory_space<vmem>>, vector<1x128xf32>
    %4 = vector.broadcast %3 : vector<1x128xf32> to vector<8x128xf32>
    %5 = arith.addf %2, %4 : vector<8x128xf32>
    %cst_5 = arith.constant 0.000000e+00 : f32
    %6 = vector.broadcast %cst_5 : f32 to vector<8x128xf32>
    %7 = arith.maximumf %5, %6 : vector<8x128xf32>
    %c0_6 = arith.constant 0 : index
    %c0_7 = arith.constant 0 : index
    %8 = vector.load %arg4[%c0_6, %c0_7] : memref<128x128xf32, #tpu.memory_space<vmem>>, vector<128x128xf32>
    %cst_8 = arith.constant dense<0.000000e+00> : vector<8x128xf32>
    %9 = tpu.matmul %7, %8, %cst_8 {dimension_numbers = #tpu.dot_dimension_numbers<[1], [0], [0], [1], [0, 0, 1, 1], [], []>} : vector<8x128xf32>, vector<128x128xf32>, vector<8x128xf32> -> vector<8x128xf32>
    %c0_9 = arith.constant 0 : index
    %c0_10 = arith.constant 0 : index
    %10 = vector.load %arg5[%c0_9, %c0_10] : memref<1x128xf32, #tpu.memory_space<vmem>>, vector<1x128xf32>
    %11 = vector.broadcast %10 : vector<1x128xf32> to vector<8x128xf32>
    %12 = arith.addf %9, %11 : vector<8x128xf32>
    %cst_11 = arith.constant 0.000000e+00 : f32
    %13 = vector.broadcast %cst_11 : f32 to vector<8x128xf32>
    %14 = arith.maximumf %12, %13 : vector<8x128xf32>
    %c0_12 = arith.constant 0 : index
    %c0_13 = arith.constant 0 : index
    %15 = vector.load %arg6[%c0_12, %c0_13] : memref<128x128xf32, #tpu.memory_space<vmem>>, vector<128x128xf32>
    %cst_14 = arith.constant dense<0.000000e+00> : vector<8x128xf32>
    %16 = tpu.matmul %14, %15, %cst_14 {dimension_numbers = #tpu.dot_dimension_numbers<[1], [0], [0], [1], [0, 0, 1, 1], [], []>} : vector<8x128xf32>, vector<128x128xf32>, vector<8x128xf32> -> vector<8x128xf32>
    %c0_15 = arith.constant 0 : index
    %c0_16 = arith.constant 0 : index
    %17 = vector.load %arg7[%c0_15, %c0_16] : memref<1x128xf32, #tpu.memory_space<vmem>>, vector<1x128xf32>
    %18 = vector.broadcast %17 : vector<1x128xf32> to vector<8x128xf32>
    %19 = arith.addf %16, %18 : vector<8x128xf32>
    %c0_17 = arith.constant 0 : index
    %c0_18 = arith.constant 0 : index
    %20 = vector.load %arg8[%c0_17, %c0_18] : memref<8x128xf32, #tpu.memory_space<vmem>>, vector<8x128xf32>
    tpu.vector_store %arg8[%c0_17, %c0_18], %19 {strides = array<i32>} : memref<8x128xf32, #tpu.memory_space<vmem>>, vector<8x128xf32>,
    return
  }
  func.func @transform_0(%arg0: i32) -> (i32, i32) {
    %c0_i32 = arith.constant 0 : i32
    %c0_i32_0 = arith.constant 0 : i32
    return %arg0, %c0_i32 : i32, i32
  }
  func.func @transform_1(%arg0: i32) -> (i32, i32) {
    %c0_i32 = arith.constant 0 : i32
    %c0_i32_0 = arith.constant 0 : i32
    %c0_i32_1 = arith.constant 0 : i32
    return %c0_i32, %c0_i32_0 : i32, i32
  }
  func.func @transform_2(%arg0: i32) -> (i32, i32) {
    %c0_i32 = arith.constant 0 : i32
    %c0_i32_0 = arith.constant 0 : i32
    %c0_i32_1 = arith.constant 0 : i32
    return %c0_i32, %c0_i32_0 : i32, i32
  }
  func.func @transform_3(%arg0: i32) -> (i32, i32) {
    %c0_i32 = arith.constant 0 : i32
    %c0_i32_0 = arith.constant 0 : i32
    %c0_i32_1 = arith.constant 0 : i32
    return %c0_i32, %c0_i32_0 : i32, i32
  }
  func.func @transform_4(%arg0: i32) -> (i32, i32) {
    %c0_i32 = arith.constant 0 : i32
    %c0_i32_0 = arith.constant 0 : i32
    %c0_i32_1 = arith.constant 0 : i32
    return %c0_i32, %c0_i32_0 : i32, i32
  }
  func.func @transform_5(%arg0: i32) -> (i32, i32) {
    %c0_i32 = arith.constant 0 : i32
    %c0_i32_0 = arith.constant 0 : i32
    %c0_i32_1 = arith.constant 0 : i32
    return %c0_i32, %c0_i32_0 : i32, i32
  }
  func.func @transform_6(%arg0: i32) -> (i32, i32) {
    %c0_i32 = arith.constant 0 : i32
    %c0_i32_0 = arith.constant 0 : i32
    %c0_i32_1 = arith.constant 0 : i32
    return %c0_i32, %c0_i32_0 : i32, i32
  }
  func.func @transform_7(%arg0: i32) -> (i32, i32) {
    %c0_i32 = arith.constant 0 : i32
    %c0_i32_0 = arith.constant 0 : i32
    return %arg0, %c0_i32 : i32, i32
  }
}

</mosaic_0001>

<llo_original>
// kernel: tpu_custom_call.1
$region0: #{tpu_custom_call.1}
  #allocation0 [shape = 'u32[]', space=smem, size = 0x4, offset = 0x4, fixed_abs, tag = 'smem constant byte address 0x4 - core index']
  #allocation1 [shape = 'u32[144,128]{1,0:T(1,128)}', space=vmem, size = 0x12000, scoped, tag = 'internal scratch']
  %s0 = inlined_call_operand.hbm [shape: f32[2,256], index: 0, kind: input, shape index: {}]
  %s1 = inlined_call_operand.hbm [shape: f32[256,128], index: 1, kind: input, shape index: {}]
  %s2 = inlined_call_operand.vmem [shape: f32[1,128], index: 2, kind: input, shape index: {}]
  %s3 = inlined_call_operand.hbm [shape: f32[128,128], index: 3, kind: input, shape index: {}]
  %s4 = inlined_call_operand.vmem [shape: f32[1,128], index: 4, kind: input, shape index: {}]
  %s5 = inlined_call_operand.hbm [shape: f32[128,128], index: 5, kind: input, shape index: {}]
  %s6 = inlined_call_operand.vmem [shape: f32[1,128], index: 6, kind: input, shape index: {}]
  %s7 = inlined_call_operand.hbm [shape: f32[2,128], index: 7, kind: output, shape index: {}]
  %s8 = sld [smem:[#allocation0]]
  $region54: #{tpu_custom_call.1} parent=0
    _
  %s10 = ssub.s32 1, %s8
  %s11 = scalar_select 0, %s10, %s8
  $region1: #{tpu_custom_call.1} parent=0
    #allocation2 [shape = 'u8[8192]{0}', space=vmem, size = 0x2000, scoped, tag = 'input window, operand 0, single buffered']
    #allocation3 [shape = 's32[1]{0}', space=sflag, size = 0x4, scoped, tag = 'scoped memory for tpu_custom_call.1']
    #allocation4 [shape = 's32[1]{0}', space=sflag, size = 0x4, scoped, tag = 'scoped memory for tpu_custom_call.1']
    #allocation5 [shape = 'u8[131072]{0}', space=vmem, size = 0x20000, scoped, tag = 'input window, operand 1, single buffered']
    #allocation6 [shape = 's32[1]{0}', space=sflag, size = 0x4, scoped, tag = 'scoped memory for tpu_custom_call.1']
    #allocation7 [shape = 'u8[65536]{0}', space=vmem, size = 0x10000, scoped, tag = 'input window, operand 3, single buffered']
    #allocation8 [shape = 'u8[65536]{0}', space=vmem, size = 0x10000, scoped, tag = 'input window, operand 5, single buffered']
    #allocation9 [shape = 's32[1]{0}', space=sflag, size = 0x4, scoped, tag = 'scoped memory for tpu_custom_call.1']
    #allocation10 [shape = 'u8[4096]{0}', space=vmem, size = 0x1000, scoped, tag = 'output window, operand 0, single buffered']
    %12 = vsyncpa [#allocation3], 0
    %13 = vsyncpa [#allocation6], 0
    %14 = vsyncpa [#allocation9], 0
    %15 = vsyncpa [#allocation4], 0
    // Predicated region
    $region2: #{tpu_custom_call.1} parent=1 // pred_check
      _
    $region3: #{tpu_custom_call.1} parent=1 // pred_check_branch
      %17 = sbr.rel (0) target = $region5
    $region4: #{tpu_custom_call.1} parent=1 // pred_region
      %s19 = ssub.s32 256, 64
      %20 = vsyncadd [#allocation3], %s19
      %s21 = sshll.u32 [#allocation2], 4
      %s22 = int_to_ptr.vmem [resolvable:$true] %s21
      %27 = dma.hbm_to_vmem [thread:$0]  %s0, 64, %s22, [#allocation3], 64, 64, 4
    $region5: #{tpu_custom_call.1} parent=1 // pred_fallthru
      _
    // Predicated region
    $region6: #{tpu_custom_call.1} parent=1 // pred_check
      _
    $region7: #{tpu_custom_call.1} parent=1 // pred_check_branch
      %29 = sbr.rel (0) target = $region9
    $region8: #{tpu_custom_call.1} parent=1 // pred_region
      %s31 = ssub.s32 4096, 4096
      %32 = vsyncadd [#allocation6], %s31
      %s33 = sshll.u32 [#allocation5], 4
      %s34 = int_to_ptr.vmem [resolvable:$true] %s33
      %39 = dma.hbm_to_vmem [thread:$0]  %s1, 4096, %s34, [#allocation6], 128, 128, 8
    $region9: #{tpu_custom_call.1} parent=1 // pred_fallthru
      _
    // Predicated region
    $region10: #{tpu_custom_call.1} parent=1 // pred_check
      _
    $region11: #{tpu_custom_call.1} parent=1 // pred_check_branch
      %41 = sbr.rel (0) target = $region13
    $region12: #{tpu_custom_call.1} parent=1 // pred_region
      _
    $region13: #{tpu_custom_call.1} parent=1 // pred_fallthru
      _
    // Predicated region
    $region14: #{tpu_custom_call.1} parent=1 // pred_check
      _
    $region15: #{tpu_custom_call.1} parent=1 // pred_check_branch
      %43 = sbr.rel (0) target = $region17
    $region16: #{tpu_custom_call.1} parent=1 // pred_region
      %s45 = ssub.s32 2048, 2048
      %46 = vsyncadd [#allocation6], %s45
      %s47 = sshll.u32 [#allocation7], 4
      %s48 = int_to_ptr.vmem [resolvable:$true] %s47
      %53 = dma.hbm_to_vmem [thread:$0]  %s3, 2048, %s48, [#allocation6], 128, 128, 8
    $region17: #{tpu_custom_call.1} parent=1 // pred_fallthru
      _
    // Predicated region
    $region18: #{tpu_custom_call.1} parent=1 // pred_check
      _
    $region19: #{tpu_custom_call.1} parent=1 // pred_check_branch
      %55 = sbr.rel (0) target = $region21
    $region20: #{tpu_custom_call.1} parent=1 // pred_region
      _
    $region21: #{tpu_custom_call.1} parent=1 // pred_fallthru
      _
    // Predicated region
    $region22: #{tpu_custom_call.1} parent=1 // pred_check
      _
    $region23: #{tpu_custom_call.1} parent=1 // pred_check_branch
      %57 = sbr.rel (0) target = $region25
    $region24: #{tpu_custom_call.1} parent=1 // pred_region
      %s59 = ssub.s32 2048, 2048
      %60 = vsyncadd [#allocation9], %s59
      %s61 = sshll.u32 [#allocation8], 4
      %s62 = int_to_ptr.vmem [resolvable:$true] %s61
      %67 = dma.hbm_to_vmem [thread:$0]  %s5, 2048, %s62, [#allocation9], 128, 128, 8
    $region25: #{tpu_custom_call.1} parent=1 // pred_fallthru
      _
    // Predicated region
    $region26: #{tpu_custom_call.1} parent=1 // pred_check
      _
    $region27: #{tpu_custom_call.1} parent=1 // pred_check_branch
      %69 = sbr.rel (0) target = $region29
    $region28: #{tpu_custom_call.1} parent=1 // pred_region
      _
    $region29: #{tpu_custom_call.1} parent=1 // pred_fallthru
      _
    // Predicated region
    $region30: #{tpu_custom_call.1} parent=1 // pred_check
      _
    $region31: #{tpu_custom_call.1} parent=1 // pred_check_branch
      %71 = sbr.rel (0) target = $region33
    $region32: #{tpu_custom_call.1} parent=1 // pred_region
      %72 = dma.done [#allocation3], 256
    $region33: #{tpu_custom_call.1} parent=1 // pred_fallthru
      _
    // Predicated region
    $region34: #{tpu_custom_call.1} parent=1 // pred_check
      _
    $region35: #{tpu_custom_call.1} parent=1 // pred_check_branch
      %74 = sbr.rel (0) target = $region37
    $region36: #{tpu_custom_call.1} parent=1 // pred_region
      %75 = dma.done [#allocation6], 4096
    $region37: #{tpu_custom_call.1} parent=1 // pred_fallthru
      _
    // Predicated region
    $region38: #{tpu_custom_call.1} parent=1 // pred_check
      _
    $region39: #{tpu_custom_call.1} parent=1 // pred_check_branch
      %77 = sbr.rel (0) target = $region41
    $region40: #{tpu_custom_call.1} parent=1 // pred_region
      %78 = dma.done [#allocation6], 2048
    $region41: #{tpu_custom_call.1} parent=1 // pred_fallthru
      _
    // Predicated region
    $region42: #{tpu_custom_call.1} parent=1 // pred_check
      _
    $region43: #{tpu_custom_call.1} parent=1 // pred_check_branch
      %80 = sbr.rel (0) target = $region45
    $region44: #{tpu_custom_call.1} parent=1 // pred_region
      %81 = dma.done [#allocation9], 2048
    $region45: #{tpu_custom_call.1} parent=1 // pred_fallthru
      _
    %v82 = vld [vmem:[#allocation2] sm:$0xf]
    %v83 = vld [vmem:[#allocation2 + $0x4] sm:$0xf]
    %v84 = vld [vmem:[#allocation2 + $0x8] sm:$0xf]
    %v85 = vld [vmem:[#allocation2 + $0xc] sm:$0xf]
    %v86 = vld [vmem:[#allocation5] sm:$0xff]
    %v87 = vld [vmem:[#allocation5 + $0x8] sm:$0xff]
    %v88 = vld [vmem:[#allocation5 + $0x10] sm:$0xff]
    %v89 = vld [vmem:[#allocation5 + $0x18] sm:$0xff]
    %v90 = vld [vmem:[#allocation5 + $0x20] sm:$0xff]
    %v91 = vld [vmem:[#allocation5 + $0x28] sm:$0xff]
    %v92 = vld [vmem:[#allocation5 + $0x30] sm:$0xff]
    %v93 = vld [vmem:[#allocation5 + $0x38] sm:$0xff]
    %v94 = vld [vmem:[#allocation5 + $0x40] sm:$0xff]
    %v95 = vld [vmem:[#allocation5 + $0x48] sm:$0xff]
    %v96 = vld [vmem:[#allocation5 + $0x50] sm:$0xff]
    %v97 = vld [vmem:[#allocation5 + $0x58] sm:$0xff]
    %v98 = vld [vmem:[#allocation5 + $0x60] sm:$0xff]
    %v99 = vld [vmem:[#allocation5 + $0x68] sm:$0xff]
    %v100 = vld [vmem:[#allocation5 + $0x70] sm:$0xff]
    %v101 = vld [vmem:[#allocation5 + $0x78] sm:$0xff]
    %v102 = vld [vmem:[#allocation5 + $0x80] sm:$0xff]
    %v103 = vld [vmem:[#allocation5 + $0x88] sm:$0xff]
    %v104 = vld [vmem:[#allocation5 + $0x90] sm:$0xff]
    %v105 = vld [vmem:[#allocation5 + $0x98] sm:$0xff]
    %v106 = vld [vmem:[#allocation5 + $0xa0] sm:$0xff]
    %v107 = vld [vmem:[#allocation5 + $0xa8] sm:$0xff]
    %v108 = vld [vmem:[#allocation5 + $0xb0] sm:$0xff]
    %v109 = vld [vmem:[#allocation5 + $0xb8] sm:$0xff]
    %v110 = vld [vmem:[#allocation5 + $0xc0] sm:$0xff]
    %v111 = vld [vmem:[#allocation5 + $0xc8] sm:$0xff]
    %v112 = vld [vmem:[#allocation5 + $0xd0] sm:$0xff]
    %v113 = vld [vmem:[#allocation5 + $0xd8] sm:$0xff]
    %v114 = vld [vmem:[#allocation5 + $0xe0] sm:$0xff]
    %v115 = vld [vmem:[#allocation5 + $0xe8] sm:$0xff]
    %v116 = vld [vmem:[#allocation5 + $0xf0] sm:$0xff]
    %v117 = vld [vmem:[#allocation5 + $0xf8] sm:$0xff]
    %v118 = vld [vmem:[%s2] sm:$0x1]
    %v120 = vlaneseq
    %v121 = vshrl.u32 %v120, 7
    %v122 = vsub.s32 0, %v121
    %v123 = vrot.slane %v118, %v122
    %v129 = vcombine.low %v82, %v83
    %v130 = vcombine.low %v84, %v85
    %v132 = vunpack.c.l.s4 1983009808
    %v133 = vunpack.c.0.s8 %v132
    %v134 = vlaneseq
    %v135 = vshrl.u32 %v134, 7
    %v136 = vsub.s32 %v133, %v135
    %v137 = vrot.slane %v129, %v136
    %v139 = vunpack.c.l.s4 1983009808
    %v140 = vunpack.c.0.s8 %v139
    %v141 = vlaneseq
    %v142 = vshrl.u32 %v141, 7
    %v143 = vsub.s32 %v140, %v142
    %v144 = vrot.slane %v130, %v143
    %v145 = vcombine.low %v137, %v144
    %v146 = vcombine.high %v137, %v144
    %149 = vmatprep.subr.mxu0 0.0
    %150 = vmatpush1.msra.mxu0 %v86
    %151 = vmatprep.subr.mxu0 0.0
    %152 = vmatpush1.msra.mxu0 %v87
    %153 = vmatprep.subr.mxu0 0.0
    %154 = vmatpush1.msra.mxu0 %v88
    %155 = vmatprep.subr.mxu0 0.0
    %156 = vmatpush1.msra.mxu0 %v89
    %157 = vmatprep.subr.mxu0 0.0
    %158 = vmatpush1.msra.mxu0 %v90
    %159 = vmatprep.subr.mxu0 0.0
    %160 = vmatpush1.msra.mxu0 %v91
    %161 = vmatprep.subr.mxu0 0.0
    %162 = vmatpush1.msra.mxu0 %v92
    %163 = vmatprep.subr.mxu0 0.0
    %164 = vmatpush1.msra.mxu0 %v93
    %165 = vmatprep.subr.mxu0 0.0
    %166 = vmatpush1.msra.mxu0 %v94
    %167 = vmatprep.subr.mxu0 0.0
    %168 = vmatpush1.msra.mxu0 %v95
    %169 = vmatprep.subr.mxu0 0.0
    %170 = vmatpush1.msra.mxu0 %v96
    %171 = vmatprep.subr.mxu0 0.0
    %172 = vmatpush1.msra.mxu0 %v97
    %173 = vmatprep.subr.mxu0 0.0
    %174 = vmatpush1.msra.mxu0 %v98
    %175 = vmatprep.subr.mxu0 0.0
    %176 = vmatpush1.msra.mxu0 %v99
    %177 = vmatprep.subr.mxu0 0.0
    %178 = vmatpush1.msra.mxu0 %v100
    %179 = vmatprep.subr.mxu0 0.0
    %180 = vmatpush1.msra.mxu0 %v101
    %181 = vmatprep.subr.mxu0 0.0
    %182 = vmatpush1.msra.mxu0 %v102
    %183 = vmatprep.subr.mxu0 0.0
    %184 = vmatpush1.msra.mxu0 %v103
    %185 = vmatprep.subr.mxu0 0.0
    %186 = vmatpush1.msra.mxu0 %v104
    %187 = vmatprep.subr.mxu0 0.0
    %188 = vmatpush1.msra.mxu0 %v105
    %189 = vmatprep.subr.mxu0 0.0
    %190 = vmatpush1.msra.mxu0 %v106
    %191 = vmatprep.subr.mxu0 0.0
    %192 = vmatpush1.msra.mxu0 %v107
    %193 = vmatprep.subr.mxu0 0.0
    %194 = vmatpush1.msra.mxu0 %v108
    %195 = vmatprep.subr.mxu0 0.0
    %196 = vmatpush1.msra.mxu0 %v109
    %197 = vmatprep.subr.mxu0 0.0
    %198 = vmatpush1.msra.mxu0 %v110
    %199 = vmatprep.subr.mxu0 0.0
    %200 = vmatpush1.msra.mxu0 %v111
    %201 = vmatprep.subr.mxu0 0.0
    %202 = vmatpush1.msra.mxu0 %v112
    %203 = vmatprep.subr.mxu0 0.0
    %204 = vmatpush1.msra.mxu0 %v113
    %205 = vmatprep.subr.mxu0 0.0
    %206 = vmatpush1.msra.mxu0 %v114
    %207 = vmatprep.subr.mxu0 0.0
    %208 = vmatpush1.msra.mxu0 %v115
    %209 = vmatprep.subr.mxu0 0.0
    %210 = vmatpush1.msra.mxu0 %v116
    %211 = vmatprep.subr.mxu0 0.0
    %212 = vmatpush1.msra.mxu0 %v117
    %213 = vmatprep.mubr.f32.mxu0 %v146
    %214 = vmatmul.mubr.f32.gmra.mrb[0].mxu0 %v145
    %v215 = vpop.f32.mrb[0].mxu0
    %v216 = vadd.f32 %v123, %v215
    %v217 = vpop.f32.mrb[0].mxu0
    %218 = vdwg.mxu0
    %v219 = vmax.f32 %v216, 0.0
    %v220 = vld [vmem:[#allocation7] sm:$0xff]
    %v221 = vld [vmem:[#allocation7 + $0x8] sm:$0xff]
    %v222 = vld [vmem:[#allocation7 + $0x10] sm:$0xff]
    %v223 = vld [vmem:[#allocation7 + $0x18] sm:$0xff]
    %v224 = vld [vmem:[#allocation7 + $0x20] sm:$0xff]
    %v225 = vld [vmem:[#allocation7 + $0x28] sm:$0xff]
    %v226 = vld [vmem:[#allocation7 + $0x30] sm:$0xff]
    %v227 = vld [vmem:[#allocation7 + $0x38] sm:$0xff]
    %v228 = vld [vmem:[#allocation7 + $0x40] sm:$0xff]
    %v229 = vld [vmem:[#allocation7 + $0x48] sm:$0xff]
    %v230 = vld [vmem:[#allocation7 + $0x50] sm:$0xff]
    %v231 = vld [vmem:[#allocation7 + $0x58] sm:$0xff]
    %v232 = vld [vmem:[#allocation7 + $0x60] sm:$0xff]
    %v233 = vld [vmem:[#allocation7 + $0x68] sm:$0xff]
    %v234 = vld [vmem:[#allocation7 + $0x70] sm:$0xff]
    %v235 = vld [vmem:[#allocation7 + $0x78] sm:$0xff]
    %v236 = vld [vmem:[%s4] sm:$0x1]
    %v238 = vlaneseq
    %v239 = vshrl.u32 %v238, 7
    %v240 = vsub.s32 0, %v239
    %v241 = vrot.slane %v236, %v240
    %243 = vmatprep.subr.mxu0 0.0
    %244 = vmatpush1.msra.mxu0 %v220
    %245 = vmatprep.subr.mxu0 0.0
    %246 = vmatpush1.msra.mxu0 %v221
    %247 = vmatprep.subr.mxu0 0.0
    %248 = vmatpush1.msra.mxu0 %v222
    %249 = vmatprep.subr.mxu0 0.0
    %250 = vmatpush1.msra.mxu0 %v223
    %251 = vmatprep.subr.mxu0 0.0
    %252 = vmatpush1.msra.mxu0 %v224
    %253 = vmatprep.subr.mxu0 0.0
    %254 = vmatpush1.msra.mxu0 %v225
    %255 = vmatprep.subr.mxu0 0.0
    %256 = vmatpush1.msra.mxu0 %v226
    %257 = vmatprep.subr.mxu0 0.0
    %258 = vmatpush1.msra.mxu0 %v227
    %259 = vmatprep.subr.mxu0 0.0
    %260 = vmatpush1.msra.mxu0 %v228
    %261 = vmatprep.subr.mxu0 0.0
    %262 = vmatpush1.msra.mxu0 %v229
    %263 = vmatprep.subr.mxu0 0.0
    %264 = vmatpush1.msra.mxu0 %v230
    %265 = vmatprep.subr.mxu0 0.0
    %266 = vmatpush1.msra.mxu0 %v231
    %267 = vmatprep.subr.mxu0 0.0
    %268 = vmatpush1.msra.mxu0 %v232
    %269 = vmatprep.subr.mxu0 0.0
    %270 = vmatpush1.msra.mxu0 %v233
    %271 = vmatprep.subr.mxu0 0.0
    %272 = vmatpush1.msra.mxu0 %v234
    %273 = vmatprep.subr.mxu0 0.0
    %274 = vmatpush1.msra.mxu0 %v235
    %275 = vmatprep.subr.mxu0 0.0
    %276 = vmatpush1.msra.mxu0 0.0
    %277 = vmatprep.subr.mxu0 0.0
    %278 = vmatpush1.msra.mxu0 0.0
    %279 = vmatprep.subr.mxu0 0.0
    %280 = vmatpush1.msra.mxu0 0.0
    %281 = vmatprep.subr.mxu0 0.0
    %282 = vmatpush1.msra.mxu0 0.0
    %283 = vmatprep.subr.mxu0 0.0
    %284 = vmatpush1.msra.mxu0 0.0
    %285 = vmatprep.subr.mxu0 0.0
    %286 = vmatpush1.msra.mxu0 0.0
    %287 = vmatprep.subr.mxu0 0.0
    %288 = vmatpush1.msra.mxu0 0.0
    %289 = vmatprep.subr.mxu0 0.0
    %290 = vmatpush1.msra.mxu0 0.0
    %291 = vmatprep.subr.mxu0 0.0
    %292 = vmatpush1.msra.mxu0 0.0
    %293 = vmatprep.subr.mxu0 0.0
    %294 = vmatpush1.msra.mxu0 0.0
    %295 = vmatprep.subr.mxu0 0.0
    %296 = vmatpush1.msra.mxu0 0.0
    %297 = vmatprep.subr.mxu0 0.0
    %298 = vmatpush1.msra.mxu0 0.0
    %299 = vmatprep.subr.mxu0 0.0
    %300 = vmatpush1.msra.mxu0 0.0
    %301 = vmatprep.subr.mxu0 0.0
    %302 = vmatpush1.msra.mxu0 0.0
    %303 = vmatprep.subr.mxu0 0.0
    %304 = vmatpush1.msra.mxu0 0.0
    %305 = vmatprep.subr.mxu0 0.0
    %306 = vmatpush1.msra.mxu0 0.0
    %307 = vmatprep.mubr.f32.mxu0 0.0
    %308 = vmatmul.mubr.f32.gmra.mrb[0].mxu0 %v219
    %v309 = vpop.f32.mrb[0].mxu0
    %v310 = vadd.f32 %v241, %v309
    %v311 = vpop.f32.mrb[0].mxu0
    %312 = vdwg.mxu0
    %v313 = vmax.f32 %v310, 0.0
    %v314 = vld [vmem:[#allocation8] sm:$0xff]
    %v315 = vld [vmem:[#allocation8 + $0x8] sm:$0xff]
    %v316 = vld [vmem:[#allocation8 + $0x10] sm:$0xff]
    %v317 = vld [vmem:[#allocation8 + $0x18] sm:$0xff]
    %v318 = vld [vmem:[#allocation8 + $0x20] sm:$0xff]
    %v319 = vld [vmem:[#allocation8 + $0x28] sm:$0xff]
    %v320 = vld [vmem:[#allocation8 + $0x30] sm:$0xff]
    %v321 = vld [vmem:[#allocation8 + $0x38] sm:$0xff]
    %v322 = vld [vmem:[#allocation8 + $0x40] sm:$0xff]
    %v323 = vld [vmem:[#allocation8 + $0x48] sm:$0xff]
    %v324 = vld [vmem:[#allocation8 + $0x50] sm:$0xff]
    %v325 = vld [vmem:[#allocation8 + $0x58] sm:$0xff]
    %v326 = vld [vmem:[#allocation8 + $0x60] sm:$0xff]
    %v327 = vld [vmem:[#allocation8 + $0x68] sm:$0xff]
    %v328 = vld [vmem:[#allocation8 + $0x70] sm:$0xff]
    %v329 = vld [vmem:[#allocation8 + $0x78] sm:$0xff]
    %v330 = vld [vmem:[%s6] sm:$0x1]
    %v332 = vlaneseq
    %v333 = vshrl.u32 %v332, 7
    %v334 = vsub.s32 0, %v333
    %v335 = vrot.slane %v330, %v334
    %337 = vmatprep.subr.mxu0 0.0
    %338 = vmatpush1.msra.mxu0 %v314
    %339 = vmatprep.subr.mxu0 0.0
    %340 = vmatpush1.msra.mxu0 %v315
    %341 = vmatprep.subr.mxu0 0.0
    %342 = vmatpush1.msra.mxu0 %v316
    %343 = vmatprep.subr.mxu0 0.0
    %344 = vmatpush1.msra.mxu0 %v317
    %345 = vmatprep.subr.mxu0 0.0
    %346 = vmatpush1.msra.mxu0 %v318
    %347 = vmatprep.subr.mxu0 0.0
    %348 = vmatpush1.msra.mxu0 %v319
    %349 = vmatprep.subr.mxu0 0.0
    %350 = vmatpush1.msra.mxu0 %v320
    %351 = vmatprep.subr.mxu0 0.0
    %352 = vmatpush1.msra.mxu0 %v321
    %353 = vmatprep.subr.mxu0 0.0
    %354 = vmatpush1.msra.mxu0 %v322
    %355 = vmatprep.subr.mxu0 0.0
    %356 = vmatpush1.msra.mxu0 %v323
    %357 = vmatprep.subr.mxu0 0.0
    %358 = vmatpush1.msra.mxu0 %v324
    %359 = vmatprep.subr.mxu0 0.0
    %360 = vmatpush1.msra.mxu0 %v325
    %361 = vmatprep.subr.mxu0 0.0
    %362 = vmatpush1.msra.mxu0 %v326
    %363 = vmatprep.subr.mxu0 0.0
    %364 = vmatpush1.msra.mxu0 %v327
    %365 = vmatprep.subr.mxu0 0.0
    %366 = vmatpush1.msra.mxu0 %v328
    %367 = vmatprep.subr.mxu0 0.0
    %368 = vmatpush1.msra.mxu0 %v329
    %369 = vmatprep.subr.mxu0 0.0
    %370 = vmatpush1.msra.mxu0 0.0
    %371 = vmatprep.subr.mxu0 0.0
    %372 = vmatpush1.msra.mxu0 0.0
    %373 = vmatprep.subr.mxu0 0.0
    %374 = vmatpush1.msra.mxu0 0.0
    %375 = vmatprep.subr.mxu0 0.0
    %376 = vmatpush1.msra.mxu0 0.0
    %377 = vmatprep.subr.mxu0 0.0
    %378 = vmatpush1.msra.mxu0 0.0
    %379 = vmatprep.subr.mxu0 0.0
    %380 = vmatpush1.msra.mxu0 0.0
    %381 = vmatprep.subr.mxu0 0.0
    %382 = vmatpush1.msra.mxu0 0.0
    %383 = vmatprep.subr.mxu0 0.0
    %384 = vmatpush1.msra.mxu0 0.0
    %385 = vmatprep.subr.mxu0 0.0
    %386 = vmatpush1.msra.mxu0 0.0
    %387 = vmatprep.subr.mxu0 0.0
    %388 = vmatpush1.msra.mxu0 0.0
    %389 = vmatprep.subr.mxu0 0.0
    %390 = vmatpush1.msra.mxu0 0.0
    %391 = vmatprep.subr.mxu0 0.0
    %392 = vmatpush1.msra.mxu0 0.0
    %393 = vmatprep.subr.mxu0 0.0
    %394 = vmatpush1.msra.mxu0 0.0
    %395 = vmatprep.subr.mxu0 0.0
    %396 = vmatpush1.msra.mxu0 0.0
    %397 = vmatprep.subr.mxu0 0.0
    %398 = vmatpush1.msra.mxu0 0.0
    %399 = vmatprep.subr.mxu0 0.0
    %400 = vmatpush1.msra.mxu0 0.0
    %401 = vmatprep.mubr.f32.mxu0 0.0
    %402 = vmatmul.mubr.f32.gmra.mrb[0].mxu0 %v313
    %v403 = vpop.f32.mrb[0].mxu0
    %v404 = vadd.f32 %v335, %v403
    %v405 = vpop.f32.mrb[0].mxu0
    %406 = vdwg.mxu0
    %407 = vst [vmem:[#allocation10] sm:$0xff] %v404
    // Predicated region
    $region46: #{tpu_custom_call.1} parent=1 // pred_check
      _
    $region47: #{tpu_custom_call.1} parent=1 // pred_check_branch
      %409 = sbr.rel (0) target = $region49
    $region48: #{tpu_custom_call.1} parent=1 // pred_region
      %s411 = ssub.s32 128, 32
      %412 = vsyncadd [#allocation4], %s411
      %s413 = sshll.u32 [#allocation10], 4
      %s414 = int_to_ptr.vmem [resolvable:$true] %s413
      %419 = dma.vmem_to_hbm [thread:$0]  %s414, 32, %s7, [#allocation4], 32, 32, 2
    $region49: #{tpu_custom_call.1} parent=1 // pred_fallthru
      _
    // Predicated region
    $region50: #{tpu_custom_call.1} parent=1 // pred_check
      _
    $region51: #{tpu_custom_call.1} parent=1 // pred_check_branch
      %421 = sbr.rel (0) target = $region53
    $region52: #{tpu_custom_call.1} parent=1 // pred_region
      %422 = dma.done [#allocation4], 128
    $region53: #{tpu_custom_call.1} parent=1 // pred_fallthru
      _
    %423 = vsyncpa [#allocation3], 1
    %424 = vsyncpa [#allocation6], 1
    %425 = vsyncpa [#allocation9], 1
    %426 = vsyncpa [#allocation4], 1

</llo_original>
